<compile_context>
chip_gen: v6e
topology: v6e:2x2x1
jax: 0.10.0
libtpu: 0.0.40
codegen_flags: <defaults>
</compile_context>

<pallas_src>
import math

import jax
import jax.numpy as jnp
from jax.experimental import pallas as pl
from jax.experimental.pallas import tpu as pltpu

DEFAULT_TILE_B = 2048         # cap on rows per grid step (large B amortizes step overhead)
FUSE_BLOCKDIAG_MAX_2H = 128   # block-diagonal L2/L3 fusion only when 2*H <= 128


def _round_up(x, m):
    return ((x + m - 1) // m) * m


# ---------------------------------------------------------------------------
# Kernels
# ---------------------------------------------------------------------------
def _qnet_kernel_fused(xu_ref, w1_ref, b1_ref, w2_ref, b2_ref, w3_ref, b3_ref,
                       out_ref):
    """Small-H path: both towers fused, layers 2/3 block-diagonal."""
    # layer 1: bf16 x bf16 -> f32 accumulate; bias/ReLU in f32
    h = jnp.dot(xu_ref[...], w1_ref[...], preferred_element_type=jnp.float32)
    h = jnp.maximum(h + b1_ref[...], 0.0)

    # layer 2 (blockdiag(W2, W5))
    h = jnp.dot(h.astype(w2_ref.dtype), w2_ref[...],
                preferred_element_type=jnp.float32)
    h = jnp.maximum(h + b2_ref[...], 0.0)

    # layer 3 (blockdiag(W3, W6)) -> (tb, 2): col 0 = Q1, col 1 = Q2
    out = jnp.dot(h.astype(w3_ref.dtype), w3_ref[...],
                  preferred_element_type=jnp.float32) + b3_ref[...]
    out_ref[...] = out.astype(out_ref.dtype)


def _qnet_kernel_split(xu_ref, w1_ref, b1_ref, w2a_ref, w2b_ref, b2_ref,
                       w3a_ref, w3b_ref, b3_ref, out_ref):
    """Large-H path: fused layer 1 (width 2H), per-tower layers 2/3."""
    hdim = w2a_ref.shape[0]

    # layer 1 (single K = ni+na dot, output width 2H covers both towers)
    h = jnp.dot(xu_ref[...], w1_ref[...], preferred_element_type=jnp.float32)
    h = jnp.maximum(h + b1_ref[...], 0.0).astype(w2a_ref.dtype)

    h1 = h[:, :hdim]          # tower 1 activations (static lane slice)
    h2 = h[:, hdim:]          # tower 2 activations

    # layer 2, per tower (H x H each instead of one zero-filled 2H x 2H)
    y1 = jnp.dot(h1, w2a_ref[...], preferred_element_type=jnp.float32)
    y1 = jnp.maximum(y1 + b2_ref[:, :hdim], 0.0).astype(w3a_ref.dtype)
    y2 = jnp.dot(h2, w2b_ref[...], preferred_element_type=jnp.float32)
    y2 = jnp.maximum(y2 + b2_ref[:, hdim:], 0.0).astype(w3b_ref.dtype)

    # layer 3 heads -> (tb, 1) each, packed into (tb, 2)
    o1 = jnp.dot(y1, w3a_ref[...], preferred_element_type=jnp.float32) + b3_ref[:, 0:1]
    o2 = jnp.dot(y2, w3b_ref[...], preferred_element_type=jnp.float32) + b3_ref[:, 1:2]
    out_ref[...] = jnp.concatenate([o1, o2], axis=-1).astype(out_ref.dtype)


# ---------------------------------------------------------------------------
# Wrapper
# ---------------------------------------------------------------------------
def qnetwork_forward(state, action, fused, *, tile_b=DEFAULT_TILE_B):
    """state: (B, num_inputs) f32, action: (B, num_actions) f32.
    `fused` is the output of fuse_params. Returns (q1, q2), each (B, 1) f32."""
    mode, arrays = fused
    B = state.shape[0]
    d = state.shape[1] + action.shape[1]
    compute_dtype = arrays[0].dtype           # weight dtype (bf16 by default)
    h2 = arrays[0].shape[1]                   # 2 * hidden_dim

    # One cheap concat + cast in the wrapper -> single K = ni+na dot in layer 1.
    xu = jnp.concatenate([state, action], axis=1).astype(compute_dtype)

    # Tile selection: >= 2 grid steps whenever B > 8 (v7x megacore), tiles as
    # large as the cap allows, batch zero-padded to a multiple of the tile.
    half = _round_up((B + 1) // 2, 8)
    tb = max(8, min(tile_b, half))
    bp = _round_up(B, tb)
    if bp != B:
        xu = jnp.pad(xu, ((0, bp - B), (0, 0)))
    grid = (bp // tb,)

    xu_spec = pl.BlockSpec((tb, d), lambda i: (i, 0))
    out_spec = pl.BlockSpec((tb, 2), lambda i: (i, 0))

    def _whole(a):  # weights / biases resident across all grid steps
        return pl.BlockSpec(a.shape, lambda i: (0, 0))

    in_specs = [xu_spec] + [_whole(a) for a in arrays]

    if mode == "fused":
        kernel = _qnet_kernel_fused
        flops = 2 * bp * (d * h2 + h2 * h2 + h2 * 2)
    else:
        kernel = _qnet_kernel_split
        h = h2 // 2
        flops = 2 * bp * (d * h2 + 2 * h * h + 2 * h)

    weight_bytes = sum(int(a.size) * a.dtype.itemsize for a in arrays)
    io_bytes = int(xu.size) * xu.dtype.itemsize + bp * 2 * 4

    # Working-set estimate: double-buffered xu/out tiles + resident weights
    # (double-buffered conservatively) + f32/bf16 intermediates, clamped so the
    # limit never exceeds ~56 MiB (v7x has only 64 MiB VMEM).
    per_step = tb * d * 2 + tb * 2 * 4
    intermediates = tb * h2 * (4 + 2) * 2
    vmem_est = 2 * (per_step + weight_bytes) + intermediates + (2 << 20)
    vmem_limit = int(min(56 * 1024 * 1024, max(32 * 1024 * 1024, 2 * vmem_est)))

    # TODO(synk): if the vst.msk store epilogue ever shows on the critical
    # path, emit the output lane-dense as (2, bp) and transpose in the wrapper.
    q = pl.pallas_call(
        kernel,
        out_shape=jax.ShapeDtypeStruct((bp, 2), jnp.float32),
        grid=grid,
        in_specs=in_specs,
        out_specs=out_spec,
        compiler_params=pltpu.CompilerParams(
            dimension_semantics=("parallel",),
            vmem_limit_bytes=vmem_limit,
        ),
        cost_estimate=pl.CostEstimate(
            flops=int(flops),
            transcendentals=0,
            bytes_accessed=int(io_bytes + weight_bytes),
        ),
    )(xu, *arrays)

    q = q[:B]
    return q[:, 0:1], q[:, 1:2]


# ---------------------------------------------------------------------------
# Parameter construction (matches torch xavier_uniform_ + zero bias)
# ---------------------------------------------------------------------------
def _xavier_uniform(key, fan_in, fan_out, dtype=jnp.float32):
    bound = math.sqrt(6.0 / (fan_in + fan_out))
    # stored as (in, out) so the kernel computes x @ W (== x @ W_torch.T)
    return jax.random.uniform(key, (fan_in, fan_out), dtype=dtype,
                              minval=-bound, maxval=bound)


def init_qnetwork_params(key, num_inputs, num_actions, hidden_dim):
    d = num_inputs + num_actions
    ks = jax.random.split(key, 6)
    w1 = _xavier_uniform(ks[0], d, hidden_dim)
    b1 = jnp.zeros((1, hidden_dim), jnp.float32)
    w2 = _xavier_uniform(ks[1], hidden_dim, hidden_dim)
    b2 = jnp.zeros((1, hidden_dim), jnp.float32)
    w3 = _xavier_uniform(ks[2], hidden_dim, 1)
    b3 = jnp.zeros((1, 1), jnp.float32)
    w4 = _xavier_uniform(ks[3], d, hidden_dim)
    b4 = jnp.zeros((1, hidden_dim), jnp.float32)
    w5 = _xavier_uniform(ks[4], hidden_dim, hidden_dim)
    b5 = jnp.zeros((1, hidden_dim), jnp.float32)
    w6 = _xavier_uniform(ks[5], hidden_dim, 1)
    b6 = jnp.zeros((1, 1), jnp.float32)
    return (w1, b1, w2, b2, w3, b3, w4, b4, w5, b5, w6, b6)


def fuse_params(params, *, weight_dtype=jnp.bfloat16):
    """Build the fused weights consumed by the kernel.

    Layer 1 is always fused across the two towers: W1|W4 -> (d, 2H), bf16.
    Layers 2/3 use the block-diagonal form only for small H (2H <= 128);
    otherwise the per-tower matrices are kept separate. Biases stay f32 so
    bias/ReLU run on the f32 accumulator (v5e-friendly)."""
    (w1, b1, w2, b2, w3, b3, w4, b4, w5, b5, w6, b6) = params
    h = w1.shape[1]
    w1f = jnp.concatenate([w1, w4], axis=1).astype(weight_dtype)      # (d, 2H)
    b1f = jnp.concatenate([b1, b4], axis=1).astype(jnp.float32)       # (1, 2H)
    b2f = jnp.concatenate([b2, b5], axis=1).astype(jnp.float32)       # (1, 2H)
    b3f = jnp.concatenate([b3, b6], axis=1).astype(jnp.float32)       # (1, 2)

    if 2 * h <= FUSE_BLOCKDIAG_MAX_2H:
        w2f = jnp.zeros((2 * h, 2 * h), jnp.float32)
        w2f = w2f.at[:h, :h].set(w2).at[h:, h:].set(w5).astype(weight_dtype)
        w3f = jnp.zeros((2 * h, 2), jnp.float32)
        w3f = w3f.at[:h, 0:1].set(w3).at[h:, 1:2].set(w6).astype(weight_dtype)
        return ("fused", (w1f, b1f, w2f, b2f, w3f, b3f))

    return ("split", (w1f, b1f,
                      w2.astype(weight_dtype), w5.astype(weight_dtype), b2f,
                      w3.astype(weight_dtype), w6.astype(weight_dtype), b3f))


# ---------------------------------------------------------------------------
# Pure-JAX f32 reference (unfused, mirrors the PyTorch module exactly)
# ---------------------------------------------------------------------------
def _reference_forward(state, action, params):
    (w1, b1, w2, b2, w3, b3, w4, b4, w5, b5, w6, b6) = params
    xu = jnp.concatenate([state, action], axis=1)
    x1 = jnp.maximum(xu @ w1 + b1, 0.0)
    x1 = jnp.maximum(x1 @ w2 + b2, 0.0)
    x1 = x1 @ w3 + b3
    x2 = jnp.maximum(xu @ w4 + b4, 0.0)
    x2 = jnp.maximum(x2 @ w5 + b5, 0.0)
    x2 = x2 @ w6 + b6
    return x1, x2


if __name__ == "__main__":
    B, NUM_INPUTS, NUM_ACTIONS = 4, 16, 4

    key = jax.random.PRNGKey(0)
    k_state, k_action, k_p1, k_p2 = jax.random.split(key, 4)

    state = jax.random.normal(k_state, (B, NUM_INPUTS), dtype=jnp.float32)
    action = jax.random.normal(k_action, (B, NUM_ACTIONS), dtype=jnp.float32)

    # --- small hidden dim -> fused block-diagonal path ---
    params_small = init_qnetwork_params(k_p1, NUM_INPUTS, NUM_ACTIONS, 32)
    q1, q2 = qnetwork_forward(state, action, fuse_params(params_small))
    q1 = jax.block_until_ready(q1)
    q2 = jax.block_until_ready(q2)
    r1, r2 = _reference_forward(state, action, params_small)
    assert q1.shape == (B, 1) and q2.shape == (B, 1)
    # bf16 operands (f32 accumulation) -> loosened tolerance vs f32 reference
    assert jnp.allclose(q1, r1, atol=5e-2, rtol=5e-2)
    assert jnp.allclose(q2, r2, atol=5e-2, rtol=5e-2)

    # --- larger hidden dim -> split per-tower layer-2/3 path ---
    params_large = init_qnetwork_params(k_p2, NUM_INPUTS, NUM_ACTIONS, 128)
    q1, q2 = qnetwork_forward(state, action, fuse_params(params_large))
    q1 = jax.block_until_ready(q1)
    q2 = jax.block_until_ready(q2)
    r1, r2 = _reference_forward(state, action, params_large)
    assert q1.shape == (B, 1) and q2.shape == (B, 1)
    assert jnp.allclose(q1, r1, atol=5e-2, rtol=5e-2)
    assert jnp.allclose(q2, r2, atol=5e-2, rtol=5e-2)

    print("KERNEL_OK")
</pallas_src>

<mosaic_0001>
module attributes {stable_mosaic.version = 11 : i64} {
  func.func @_qnet_kernel_fused(%arg0: i32, %arg1: memref<8x20xbf16, #tpu.memory_space<vmem>>, %arg2: memref<20x64xbf16, #tpu.memory_space<vmem>>, %arg3: memref<1x64xf32, #tpu.memory_space<vmem>>, %arg4: memref<64x64xbf16, #tpu.memory_space<vmem>>, %arg5: memref<1x64xf32, #tpu.memory_space<vmem>>, %arg6: memref<64x2xbf16, #tpu.memory_space<vmem>>, %arg7: memref<1x2xf32, #tpu.memory_space<vmem>>, %arg8: memref<8x2xf32, #tpu.memory_space<vmem>>) attributes {dimension_semantics = [#tpu.dimension_semantics<parallel>], iteration_bounds = array<i64: 1>, scalar_prefetch = 0 : i64, scratch_operands = 0 : i64, tpu.core_type = #tpu.core_type<tc>, window_params = [{transform_indices = @transform_0, window_bounds = array<i64: 8, 20>}, {pipeline_mode = #tpu.pipeline_mode<synchronous>, transform_indices = @transform_1, window_bounds = array<i64: 20, 64>}, {pipeline_mode = #tpu.pipeline_mode<synchronous>, transform_indices = @transform_2, window_bounds = array<i64: 1, 64>}, {pipeline_mode = #tpu.pipeline_mode<synchronous>, transform_indices = @transform_3, window_bounds = array<i64: 64, 64>}, {pipeline_mode = #tpu.pipeline_mode<synchronous>, transform_indices = @transform_4, window_bounds = array<i64: 1, 64>}, {pipeline_mode = #tpu.pipeline_mode<synchronous>, transform_indices = @transform_5, window_bounds = array<i64: 64, 2>}, {pipeline_mode = #tpu.pipeline_mode<synchronous>, transform_indices = @transform_6, window_bounds = array<i64: 1, 2>}, {transform_indices = @transform_7, window_bounds = array<i64: 8, 2>}]} {
    %c0 = arith.constant 0 : index
    %c0_0 = arith.constant 0 : index
    %0 = vector.load %arg1[%c0, %c0_0] : memref<8x20xbf16, #tpu.memory_space<vmem>>, vector<8x20xbf16>
    %c0_1 = arith.constant 0 : index
    %c0_2 = arith.constant 0 : index
    %1 = vector.load %arg2[%c0_1, %c0_2] : memref<20x64xbf16, #tpu.memory_space<vmem>>, vector<20x64xbf16>
    %cst = arith.constant dense<0.000000e+00> : vector<8x64xf32>
    %2 = tpu.matmul %0, %1, %cst {dimension_numbers = #tpu.dot_dimension_numbers<[1], [0], [0], [1], [0, 0, 1, 1], [], []>} : vector<8x20xbf16>, vector<20x64xbf16>, vector<8x64xf32> -> vector<8x64xf32>
    %c0_3 = arith.constant 0 : index
    %c0_4 = arith.constant 0 : index
    %3 = vector.load %arg3[%c0_3, %c0_4] : memref<1x64xf32, #tpu.memory_space<vmem>>, vector<1x64xf32>
    %4 = vector.broadcast %3 : vector<1x64xf32> to vector<8x64xf32>
    %5 = arith.addf %2, %4 : vector<8x64xf32>
    %cst_5 = arith.constant 0.000000e+00 : f32
    %6 = vector.broadcast %cst_5 : f32 to vector<8x64xf32>
    %7 = arith.maximumf %5, %6 : vector<8x64xf32>
    %8 = arith.truncf %7 : vector<8x64xf32> to vector<8x64xbf16>
    %c0_6 = arith.constant 0 : index
    %c0_7 = arith.constant 0 : index
    %9 = vector.load %arg4[%c0_6, %c0_7] : memref<64x64xbf16, #tpu.memory_space<vmem>>, vector<64x64xbf16>
    %cst_8 = arith.constant dense<0.000000e+00> : vector<8x64xf32>
    %10 = tpu.matmul %8, %9, %cst_8 {dimension_numbers = #tpu.dot_dimension_numbers<[1], [0], [0], [1], [0, 0, 1, 1], [], []>} : vector<8x64xbf16>, vector<64x64xbf16>, vector<8x64xf32> -> vector<8x64xf32>
    %c0_9 = arith.constant 0 : index
    %c0_10 = arith.constant 0 : index
    %11 = vector.load %arg5[%c0_9, %c0_10] : memref<1x64xf32, #tpu.memory_space<vmem>>, vector<1x64xf32>
    %12 = vector.broadcast %11 : vector<1x64xf32> to vector<8x64xf32>
    %13 = arith.addf %10, %12 : vector<8x64xf32>
    %cst_11 = arith.constant 0.000000e+00 : f32
    %14 = vector.broadcast %cst_11 : f32 to vector<8x64xf32>
    %15 = arith.maximumf %13, %14 : vector<8x64xf32>
    %16 = arith.truncf %15 : vector<8x64xf32> to vector<8x64xbf16>
    %c0_12 = arith.constant 0 : index
    %c0_13 = arith.constant 0 : index
    %17 = vector.load %arg6[%c0_12, %c0_13] : memref<64x2xbf16, #tpu.memory_space<vmem>>, vector<64x2xbf16>
    %cst_14 = arith.constant dense<0.000000e+00> : vector<8x2xf32>
    %18 = tpu.matmul %16, %17, %cst_14 {dimension_numbers = #tpu.dot_dimension_numbers<[1], [0], [0], [1], [0, 0, 1, 1], [], []>} : vector<8x64xbf16>, vector<64x2xbf16>, vector<8x2xf32> -> vector<8x2xf32>
    %c0_15 = arith.constant 0 : index
    %c0_16 = arith.constant 0 : index
    %19 = vector.load %arg7[%c0_15, %c0_16] : memref<1x2xf32, #tpu.memory_space<vmem>>, vector<1x2xf32>
    %20 = vector.broadcast %19 : vector<1x2xf32> to vector<8x2xf32>
    %21 = arith.addf %18, %20 : vector<8x2xf32>
    %c0_17 = arith.constant 0 : index
    %c0_18 = arith.constant 0 : index
    %22 = vector.load %arg8[%c0_17, %c0_18] : memref<8x2xf32, #tpu.memory_space<vmem>>, vector<8x2xf32>
    tpu.vector_store %arg8[%c0_17, %c0_18], %21 {strides = array<i32>} : memref<8x2xf32, #tpu.memory_space<vmem>>, vector<8x2xf32>,
    return
  }
  func.func @transform_0(%arg0: i32) -> (i32, i32) {
    %c0_i32 = arith.constant 0 : i32
    %c0_i32_0 = arith.constant 0 : i32
    return %arg0, %c0_i32 : i32, i32
  }
  func.func @transform_1(%arg0: i32) -> (i32, i32) {
    %c0_i32 = arith.constant 0 : i32
    %c0_i32_0 = arith.constant 0 : i32
    %c0_i32_1 = arith.constant 0 : i32
    return %c0_i32, %c0_i32_0 : i32, i32
  }
  func.func @transform_2(%arg0: i32) -> (i32, i32) {
    %c0_i32 = arith.constant 0 : i32
    %c0_i32_0 = arith.constant 0 : i32
    %c0_i32_1 = arith.constant 0 : i32
    return %c0_i32, %c0_i32_0 : i32, i32
  }
  func.func @transform_3(%arg0: i32) -> (i32, i32) {
    %c0_i32 = arith.constant 0 : i32
    %c0_i32_0 = arith.constant 0 : i32
    %c0_i32_1 = arith.constant 0 : i32
    return %c0_i32, %c0_i32_0 : i32, i32
  }
  func.func @transform_4(%arg0: i32) -> (i32, i32) {
    %c0_i32 = arith.constant 0 : i32
    %c0_i32_0 = arith.constant 0 : i32
    %c0_i32_1 = arith.constant 0 : i32
    return %c0_i32, %c0_i32_0 : i32, i32
  }
  func.func @transform_5(%arg0: i32) -> (i32, i32) {
    %c0_i32 = arith.constant 0 : i32
    %c0_i32_0 = arith.constant 0 : i32
    %c0_i32_1 = arith.constant 0 : i32
    return %c0_i32, %c0_i32_0 : i32, i32
  }
  func.func @transform_6(%arg0: i32) -> (i32, i32) {
    %c0_i32 = arith.constant 0 : i32
    %c0_i32_0 = arith.constant 0 : i32
    %c0_i32_1 = arith.constant 0 : i32
    return %c0_i32, %c0_i32_0 : i32, i32
  }
  func.func @transform_7(%arg0: i32) -> (i32, i32) {
    %c0_i32 = arith.constant 0 : i32
    %c0_i32_0 = arith.constant 0 : i32
    return %arg0, %c0_i32 : i32, i32
  }
}

</mosaic_0001>

<llo_original>
// kernel: tpu_custom_call.1
$region0: #{tpu_custom_call.1}
  #allocation0 [shape = 'u32[]', space=smem, size = 0x4, offset = 0x4, fixed_abs, tag = 'smem constant byte address 0x4 - core index']
  #allocation1 [shape = 'u32[144,128]{1,0:T(1,128)}', space=vmem, size = 0x12000, scoped, tag = 'internal scratch']
  %s0 = inlined_call_operand.vmem [shape: bf16[8,20], index: 0, kind: input, shape index: {}]
  %s1 = inlined_call_operand.hbm [shape: bf16[20,64], index: 1, kind: input, shape index: {}]
  %s2 = inlined_call_operand.vmem [shape: f32[1,64], index: 2, kind: input, shape index: {}]
  %s3 = inlined_call_operand.vmem [shape: bf16[64,64], index: 3, kind: input, shape index: {}]
  %s4 = inlined_call_operand.vmem [shape: f32[1,64], index: 4, kind: input, shape index: {}]
  %s5 = inlined_call_operand.vmem [shape: bf16[64,2], index: 5, kind: input, shape index: {}]
  %s6 = inlined_call_operand.vmem [shape: f32[1,2], index: 6, kind: input, shape index: {}]
  %s7 = inlined_call_operand.vmem [shape: f32[8,2], index: 7, kind: output, shape index: {}]
  %s8 = sld [smem:[#allocation0]]
  $region42: #{tpu_custom_call.1} parent=0
    _
  %s10 = ssub.s32 1, %s8
  %s11 = scalar_select 0, %s10, %s8
  $region1: #{tpu_custom_call.1} parent=0
    #allocation2 [shape = 'u8[6144]{0}', space=vmem, size = 0x1800, scoped, tag = 'input window, operand 1, single buffered']
    #allocation3 [shape = 's32[1]{0}', space=sflag, size = 0x4, scoped, tag = 'scoped memory for tpu_custom_call.1']
    %12 = vsyncpa [#allocation3], 0
    // Predicated region
    $region2: #{tpu_custom_call.1} parent=1 // pred_check
      _
    $region3: #{tpu_custom_call.1} parent=1 // pred_check_branch
      %14 = sbr.rel (0) target = $region5
    $region4: #{tpu_custom_call.1} parent=1 // pred_region
      _
    $region5: #{tpu_custom_call.1} parent=1 // pred_fallthru
      _
    // Predicated region
    $region6: #{tpu_custom_call.1} parent=1 // pred_check
      _
    $region7: #{tpu_custom_call.1} parent=1 // pred_check_branch
      %16 = sbr.rel (0) target = $region9
    $region8: #{tpu_custom_call.1} parent=1 // pred_region
      %s18 = ssub.s32 192, 192
      %19 = vsyncadd [#allocation3], %s18
      %s20 = sshll.u32 [#allocation2], 4
      %s21 = int_to_ptr.vmem [resolvable:$true] %s20
      %26 = dma.hbm_to_vmem [thread:$0]  %s1, 192, %s21, [#allocation3], 64, 64, 4
    $region9: #{tpu_custom_call.1} parent=1 // pred_fallthru
      _
    // Predicated region
    $region10: #{tpu_custom_call.1} parent=1 // pred_check
      _
    $region11: #{tpu_custom_call.1} parent=1 // pred_check_branch
      %28 = sbr.rel (0) target = $region13
    $region12: #{tpu_custom_call.1} parent=1 // pred_region
      _
    $region13: #{tpu_custom_call.1} parent=1 // pred_fallthru
      _
    // Predicated region
    $region14: #{tpu_custom_call.1} parent=1 // pred_check
      _
    $region15: #{tpu_custom_call.1} parent=1 // pred_check_branch
      %30 = sbr.rel (0) target = $region17
    $region16: #{tpu_custom_call.1} parent=1 // pred_region
      _
    $region17: #{tpu_custom_call.1} parent=1 // pred_fallthru
      _
    // Predicated region
    $region18: #{tpu_custom_call.1} parent=1 // pred_check
      _
    $region19: #{tpu_custom_call.1} parent=1 // pred_check_branch
      %32 = sbr.rel (0) target = $region21
    $region20: #{tpu_custom_call.1} parent=1 // pred_region
      _
    $region21: #{tpu_custom_call.1} parent=1 // pred_fallthru
      _
    // Predicated region
    $region22: #{tpu_custom_call.1} parent=1 // pred_check
      _
    $region23: #{tpu_custom_call.1} parent=1 // pred_check_branch
      %34 = sbr.rel (0) target = $region25
    $region24: #{tpu_custom_call.1} parent=1 // pred_region
      _
    $region25: #{tpu_custom_call.1} parent=1 // pred_fallthru
      _
    // Predicated region
    $region26: #{tpu_custom_call.1} parent=1 // pred_check
      _
    $region27: #{tpu_custom_call.1} parent=1 // pred_check_branch
      %36 = sbr.rel (0) target = $region29
    $region28: #{tpu_custom_call.1} parent=1 // pred_region
      _
    $region29: #{tpu_custom_call.1} parent=1 // pred_fallthru
      _
    // Predicated region
    $region30: #{tpu_custom_call.1} parent=1 // pred_check
      _
    $region31: #{tpu_custom_call.1} parent=1 // pred_check_branch
      %38 = sbr.rel (0) target = $region33
    $region32: #{tpu_custom_call.1} parent=1 // pred_region
      %39 = dma.done [#allocation3], 192
    $region33: #{tpu_custom_call.1} parent=1 // pred_fallthru
      _
    %v41 = vld [vmem:[%s0] sm:$0xf]
    %v42 = vld [vmem:[#allocation2] sm:$0xf]
    %v43 = vld [vmem:[#allocation2 + $0x4] sm:$0xf]
    %v44 = vld [vmem:[#allocation2 + $0x8] sm:$0x3]
    %v45 = vld [vmem:[%s2] sm:$0x1]
    %v47 = vlaneseq
    %v48 = vshrl.u32 %v47, 7
    %v49 = vsub.s32 0, %v48
    %v50 = vrot.slane %v45, %v49
    %v55 = vunpack.c.l.b16 %v42
    %v56 = vunpack.c.l.b16 %v43
    %v57 = vunpack.c.l.b16 %v44
    %v58 = vpack.c.b16 %v56, %v55
    %v59 = vpack.c.b16 %v57, %v57
    %vm61 = vcmask 162816
    %v63 = vsel %vm61, %v41, 0
    %vm65 = vcmask 1041408
    %v67 = vsel %vm65, %v59, 0
    %69 = vmatprep.subr.bf16.mxu0 0
    %70 = vmatpush1.bf16.msra.mxu0 0
    %71 = vmatprep.subr.bf16.mxu0 0
    %72 = vmatpush1.bf16.msra.mxu0 0
    %73 = vmatprep.subr.bf16.mxu0 0
    %74 = vmatpush1.bf16.msra.mxu0 0
    %75 = vmatprep.subr.bf16.mxu0 0
    %76 = vmatpush1.bf16.msra.mxu0 0
    %77 = vmatprep.subr.bf16.mxu0 0
    %78 = vmatpush1.bf16.msra.mxu0 0
    %79 = vmatprep.subr.bf16.mxu0 0
    %80 = vmatpush1.bf16.msra.mxu0 0
    %81 = vmatprep.subr.bf16.mxu0 0
    %82 = vmatpush1.bf16.msra.mxu0 %v67
    %83 = vmatprep.subr.bf16.mxu0 0
    %84 = vmatpush1.bf16.msra.mxu0 %v58
    %85 = vmatprep.subr.bf16.mxu0 0
    %86 = vmatpush2.bf16.msra.mxu0 0
    %87 = vmatprep.subr.bf16.mxu0 0
    %88 = vmatpush2.bf16.msra.mxu0 0
    %89 = vmatprep.subr.bf16.mxu0 0
    %90 = vmatpush2.bf16.msra.mxu0 0
    %91 = vmatprep.subr.bf16.mxu0 0
    %92 = vmatpush2.bf16.msra.mxu0 0
    %93 = vmatprep.subr.bf16.mxu0 0
    %94 = vmatpush2.bf16.msra.mxu0 0
    %95 = vmatprep.subr.bf16.mxu0 0
    %96 = vmatpush2.bf16.msra.mxu0 0
    %97 = vmatprep.subr.bf16.mxu0 0
    %98 = vmatpush2.bf16.msra.mxu0 0
    %99 = vmatprep.subr.bf16.mxu0 0
    %100 = vmatpush2.bf16.msra.mxu0 0
    %101 = vmatprep.mubr.bf16.mxu0 0
    %102 = vmatmul.mubr.bf16.gmra.mxu0 %v63
    %v103 = vpop.f32.mrf.mxu0
    %v104 = vadd.f32 %v50, %v103
    %v105 = vpop.f32.mrf.mxu0
    %v106 = vpop.f32.mrf.mxu0
    %v107 = vpop.f32.mrf.mxu0
    %108 = vdwg.mxu0
    %v109 = vmax.f32 %v104, 0.0
    %v110 = vpack.c.bf16 %v109, %v109
    %v111 = vld [vmem:[%s3] sm:$0xf]
    %v112 = vld [vmem:[%s3 + $0x4] sm:$0xf]
    %v113 = vld [vmem:[%s3 + $0x8] sm:$0xf]
    %v114 = vld [vmem:[%s3 + $0xc] sm:$0xf]
    %v115 = vld [vmem:[%s3 + $0x10] sm:$0xf]
    %v116 = vld [vmem:[%s3 + $0x14] sm:$0xf]
    %v117 = vld [vmem:[%s3 + $0x18] sm:$0xf]
    %v118 = vld [vmem:[%s3 + $0x1c] sm:$0xf]
    %v119 = vld [vmem:[%s4] sm:$0x1]
    %v121 = vlaneseq
    %v122 = vshrl.u32 %v121, 7
    %v123 = vsub.s32 0, %v122
    %v124 = vrot.slane %v119, %v123
    %v134 = vunpack.c.l.b16 %v111
    %v135 = vunpack.c.l.b16 %v112
    %v136 = vunpack.c.l.b16 %v113
    %v137 = vunpack.c.l.b16 %v114
    %v138 = vunpack.c.l.b16 %v115
    %v139 = vunpack.c.l.b16 %v116
    %v140 = vunpack.c.l.b16 %v117
    %v141 = vunpack.c.l.b16 %v118
    %v142 = vpack.c.b16 %v135, %v134
    %v143 = vpack.c.b16 %v137, %v136
    %v144 = vpack.c.b16 %v139, %v138
    %v145 = vpack.c.b16 %v141, %v140
    %vm150 = vcmask 523264
    %v152 = vsel %vm150, %v110, 0
    %154 = vmatprep.subr.bf16.mxu0 0
    %155 = vmatpush1.bf16.msra.mxu0 0
    %156 = vmatprep.subr.bf16.mxu0 0
    %157 = vmatpush1.bf16.msra.mxu0 0
    %158 = vmatprep.subr.bf16.mxu0 0
    %159 = vmatpush1.bf16.msra.mxu0 0
    %160 = vmatprep.subr.bf16.mxu0 0
    %161 = vmatpush1.bf16.msra.mxu0 0
    %162 = vmatprep.subr.bf16.mxu0 0
    %163 = vmatpush1.bf16.msra.mxu0 %v145
    %164 = vmatprep.subr.bf16.mxu0 0
    %165 = vmatpush1.bf16.msra.mxu0 %v144
    %166 = vmatprep.subr.bf16.mxu0 0
    %167 = vmatpush1.bf16.msra.mxu0 %v143
    %168 = vmatprep.subr.bf16.mxu0 0
    %169 = vmatpush1.bf16.msra.mxu0 %v142
    %170 = vmatprep.subr.bf16.mxu0 0
    %171 = vmatpush2.bf16.msra.mxu0 0
    %172 = vmatprep.subr.bf16.mxu0 0
    %173 = vmatpush2.bf16.msra.mxu0 0
    %174 = vmatprep.subr.bf16.mxu0 0
    %175 = vmatpush2.bf16.msra.mxu0 0
    %176 = vmatprep.subr.bf16.mxu0 0
    %177 = vmatpush2.bf16.msra.mxu0 0
    %178 = vmatprep.subr.bf16.mxu0 0
    %179 = vmatpush2.bf16.msra.mxu0 0
    %180 = vmatprep.subr.bf16.mxu0 0
    %181 = vmatpush2.bf16.msra.mxu0 0
    %182 = vmatprep.subr.bf16.mxu0 0
    %183 = vmatpush2.bf16.msra.mxu0 0
    %184 = vmatprep.subr.bf16.mxu0 0
    %185 = vmatpush2.bf16.msra.mxu0 0
    %186 = vmatprep.mubr.bf16.mxu0 0
    %187 = vmatmul.mubr.bf16.gmra.mxu0 %v152
    %v188 = vpop.f32.mrf.mxu0
    %v189 = vadd.f32 %v124, %v188
    %v190 = vpop.f32.mrf.mxu0
    %v191 = vpop.f32.mrf.mxu0
    %v192 = vpop.f32.mrf.mxu0
    %193 = vdwg.mxu0
    %v194 = vmax.f32 %v189, 0.0
    %v195 = vpack.c.bf16 %v194, %v194
    %v196 = vld [vmem:[%s5] sm:$0xf]
    %v197 = vld [vmem:[%s5 + $0x4] sm:$0xf]
    %v198 = vld [vmem:[%s5 + $0x8] sm:$0xf]
    %v199 = vld [vmem:[%s5 + $0xc] sm:$0xf]
    %v200 = vld [vmem:[%s5 + $0x10] sm:$0xf]
    %v201 = vld [vmem:[%s5 + $0x14] sm:$0xf]
    %v202 = vld [vmem:[%s5 + $0x18] sm:$0xf]
    %v203 = vld [vmem:[%s5 + $0x1c] sm:$0xf]
    %v204 = vld [vmem:[%s6] sm:$0x1]
    %v206 = vlaneseq
    %v207 = vshrl.u32 %v206, 7
    %v208 = vsub.s32 0, %v207
    %v209 = vrot.slane %v204, %v208
    %v219 = vunpack.c.l.b16 %v196
    %v220 = vunpack.c.l.b16 %v197
    %v221 = vunpack.c.l.b16 %v198
    %v222 = vunpack.c.l.b16 %v199
    %v223 = vunpack.c.l.b16 %v200
    %v224 = vunpack.c.l.b16 %v201
    %v225 = vunpack.c.l.b16 %v202
    %v226 = vunpack.c.l.b16 %v203
    %v227 = vpack.c.b16 %v220, %v219
    %v228 = vpack.c.b16 %v222, %v221
    %v229 = vpack.c.b16 %v224, %v223
    %v230 = vpack.c.b16 %v226, %v225
    %v236 = vsel %vm150, %v195, 0
    %238 = vmatprep.subr.bf16.mxu0 0
    %239 = vmatpush1.bf16.msra.mxu0 0
    %240 = vmatprep.subr.bf16.mxu0 0
    %241 = vmatpush1.bf16.msra.mxu0 0
    %242 = vmatprep.subr.bf16.mxu0 0
    %243 = vmatpush1.bf16.msra.mxu0 0
    %244 = vmatprep.subr.bf16.mxu0 0
    %245 = vmatpush1.bf16.msra.mxu0 0
    %246 = vmatprep.subr.bf16.mxu0 0
    %247 = vmatpush1.bf16.msra.mxu0 %v230
    %248 = vmatprep.subr.bf16.mxu0 0
    %249 = vmatpush1.bf16.msra.mxu0 %v229
    %250 = vmatprep.subr.bf16.mxu0 0
    %251 = vmatpush1.bf16.msra.mxu0 %v228
    %252 = vmatprep.subr.bf16.mxu0 0
    %253 = vmatpush1.bf16.msra.mxu0 %v227
    %254 = vmatprep.subr.bf16.mxu0 0
    %255 = vmatpush2.bf16.msra.mxu0 0
    %256 = vmatprep.subr.bf16.mxu0 0
    %257 = vmatpush2.bf16.msra.mxu0 0
    %258 = vmatprep.subr.bf16.mxu0 0
    %259 = vmatpush2.bf16.msra.mxu0 0
    %260 = vmatprep.subr.bf16.mxu0 0
    %261 = vmatpush2.bf16.msra.mxu0 0
    %262 = vmatprep.subr.bf16.mxu0 0
    %263 = vmatpush2.bf16.msra.mxu0 0
    %264 = vmatprep.subr.bf16.mxu0 0
    %265 = vmatpush2.bf16.msra.mxu0 0
    %266 = vmatprep.subr.bf16.mxu0 0
    %267 = vmatpush2.bf16.msra.mxu0 0
    %268 = vmatprep.subr.bf16.mxu0 0
    %269 = vmatpush2.bf16.msra.mxu0 0
    %270 = vmatprep.mubr.bf16.mxu0 0
    %271 = vmatmul.mubr.bf16.gmra.mxu0 %v236
    %v272 = vpop.f32.mrf.mxu0
    %v273 = vadd.f32 %v209, %v272
    %v274 = vpop.f32.mrf.mxu0
    %v275 = vpop.f32.mrf.mxu0
    %v276 = vpop.f32.mrf.mxu0
    %277 = vdwg.mxu0
    %vm278 = vcmask 15360
    %279 = vst.msk [vmem:[%s7] sm:$0xff] %vm278, %v273
    // Predicated region
    $region34: #{tpu_custom_call.1} parent=1 // pred_check
      _
    $region35: #{tpu_custom_call.1} parent=1 // pred_check_branch
      %281 = sbr.rel (0) target = $region37
    $region36: #{tpu_custom_call.1} parent=1 // pred_region
      _
    $region37: #{tpu_custom_call.1} parent=1 // pred_fallthru
      _
    // Predicated region
    $region38: #{tpu_custom_call.1} parent=1 // pred_check
      _
    $region39: #{tpu_custom_call.1} parent=1 // pred_check_branch
      %283 = sbr.rel (0) target = $region41
    $region40: #{tpu_custom_call.1} parent=1 // pred_region
      _
    $region41: #{tpu_custom_call.1} parent=1 // pred_fallthru
      _
    %284 = vsyncpa [#allocation3], 1

</llo_original>
